<compile_context>
chip_gen: v5e
topology: v5e:2x2
jax: 0.10.0
libtpu: 0.0.40
codegen_flags: <defaults>
</compile_context>

<pallas_src>
import jax
import jax.numpy as jnp
from jax.experimental import pallas as pl
from jax.experimental.pallas import tpu as pltpu

LANE = 128


def _choose_tn(n, max_tn=1024):
    """Largest 128-multiple row tile that divides n, capped at max_tn.

    Prefers a tile that leaves >= 2 grid steps so a "parallel" grid axis can
    keep both v7x TensorCores busy.  max_tn=1024 keeps the double-buffered
    (tn x 128) f32 tiles far under the 32 MiB scoped-VMEM default on every
    generation (v7x has only 64 MiB VMEM total).
    """
    cands = [t for t in range(LANE, min(max_tn, n) + 1, LANE) if n % t == 0]
    if not cands:
        return n
    two_step = [t for t in cands if n // t >= 2]
    return max(two_step) if two_step else max(cands)


# ----------------------------------------------------------------------------
# Kernel 1: fused (cls + box) point FC head
#   (Linear -> BN(folded) -> ReLU) x2 -> Linear + bias, both heads at once
# ----------------------------------------------------------------------------
def _fused_fc_head_kernel(x_ref,
                          w1_ref, s1_ref, b1_ref,
                          w2_ref, s2_ref, b2_ref,
                          w3_ref, b3_ref,
                          out_ref):
    # MXU operands in bf16, f32 accumulation; elementwise (BN fold / ReLU) in f32.
    x = x_ref[...].astype(jnp.bfloat16)                                # (TN, C_in)
    h = jnp.dot(x, w1_ref[...], preferred_element_type=jnp.float32)    # (TN, H1c+H1b)
    h = jnp.maximum(h * s1_ref[...] + b1_ref[...], 0.0)
    h = jnp.dot(h.astype(jnp.bfloat16), w2_ref[...],
                preferred_element_type=jnp.float32)                    # (TN, H2c+H2b)
    h = jnp.maximum(h * s2_ref[...] + b2_ref[...], 0.0)
    o = jnp.dot(h.astype(jnp.bfloat16), w3_ref[...],
                preferred_element_type=jnp.float32) + b3_ref[...]      # (TN, 128) lane-dense
    out_ref[...] = o.astype(out_ref.dtype)


def fused_head_forward(x, fp, *, tn=None):
    """x: (N, C_in) f32; fp: fused params from fuse_head_params().

    Returns (point_cls_preds (N, num_class), point_box_preds (N, box_code)).
    """
    n, c_in = x.shape
    if tn is None:
        tn = _choose_tn(n)
    assert n % tn == 0
    w1, s1, b1 = fp["w1"], fp["s1"], fp["b1"]
    w2, s2, b2 = fp["w2"], fp["s2"], fp["b2"]
    w3, b3 = fp["w3"], fp["b3"]
    h1, h2, c_pad = w1.shape[1], w2.shape[1], w3.shape[1]

    rep = lambda i: (0, 0)  # weights: same full block every grid step
    grid_spec = pltpu.PrefetchScalarGridSpec(
        num_scalar_prefetch=0,
        grid=(n // tn,),
        in_specs=[
            pl.BlockSpec((tn, c_in), lambda i: (i, 0)),
            pl.BlockSpec((c_in, h1), rep), pl.BlockSpec((1, h1), rep), pl.BlockSpec((1, h1), rep),
            pl.BlockSpec((h1, h2), rep), pl.BlockSpec((1, h2), rep), pl.BlockSpec((1, h2), rep),
            pl.BlockSpec((h2, c_pad), rep), pl.BlockSpec((1, c_pad), rep),
        ],
        # lane-dense (128-wide) output slab -> unmasked full-width stores
        out_specs=pl.BlockSpec((tn, c_pad), lambda i: (i, 0)),
    )
    out = pl.pallas_call(
        _fused_fc_head_kernel,
        out_shape=jax.ShapeDtypeStruct((n, c_pad), jnp.float32),
        grid_spec=grid_spec,
        compiler_params=pltpu.CompilerParams(dimension_semantics=("parallel",)),
    )(x, w1, s1, b1, w2, s2, b2, w3, b3)
    ca, cb = fp["out_splits"]
    return out[:, :ca], out[:, ca:ca + cb]


# ----------------------------------------------------------------------------
# Kernel 2: sigmoid focal classification loss (alpha=0.25, gamma=2.0),
#           weighted, summed over all points/classes, deferred accumulator.
# ----------------------------------------------------------------------------
def _focal_loss_kernel(pred_ref, tgt_ref, w_ref, out_ref, acc_ref):
    @pl.when(pl.program_id(0) == 0)
    def _():
        acc_ref[...] = jnp.zeros_like(acc_ref)

    x = pred_ref[...]            # (TN, num_class) logits, f32
    t = tgt_ref[...]             # (TN, num_class) one-hot targets
    w = w_ref[...]               # (TN, 1)         per-point cls weight

    # One exp serves both sigmoid and the stable BCE log-term; the divide goes
    # to the (nearly free) approximate-reciprocal EUP path.
    e = jnp.exp(-jnp.abs(x))
    inv = pl.reciprocal(1.0 + e, approx=True)
    p = jnp.where(x >= 0, 1.0, e) * inv                    # sigmoid(x)
    alpha_w = t * 0.25 + (1.0 - t) * 0.75
    pt = t * (1.0 - p) + (1.0 - t) * p
    bce = jnp.maximum(x, 0.0) - x * t + jnp.log1p(e)       # stable BCE-with-logits
    acc_ref[...] += alpha_w * pt * pt * bce * w            # VPU-only per grid step

    # cross-lane reduction + scalar store only once, in the epilogue
    @pl.when(pl.program_id(0) == pl.num_programs(0) - 1)
    def _():
        out_ref[...] = jnp.sum(acc_ref[...]).reshape(1, 1)


def focal_cls_loss(point_cls_preds, one_hot_targets, cls_weights, *, tn=None):
    # TODO(synk): if this loss ever becomes hot at large N, present preds/targets
    # transposed as (num_class, N) so N maps to the 128-wide lane axis.
    n, nc = point_cls_preds.shape
    if tn is None:
        tn = _choose_tn(n, max_tn=2048)
    assert n % tn == 0
    grid_spec = pltpu.PrefetchScalarGridSpec(
        num_scalar_prefetch=0,
        grid=(n // tn,),
        in_specs=[
            pl.BlockSpec((tn, nc), lambda i: (i, 0)),
            pl.BlockSpec((tn, nc), lambda i: (i, 0)),
            pl.BlockSpec((tn, 1), lambda i: (i, 0)),
        ],
        out_specs=pl.BlockSpec((1, 1), lambda i: (0, 0)),
        scratch_shapes=[pltpu.VMEM((tn, nc), jnp.float32)],
    )
    out = pl.pallas_call(
        _focal_loss_kernel,
        out_shape=jax.ShapeDtypeStruct((1, 1), jnp.float32),
        grid_spec=grid_spec,
        # Accumulation over the grid axis -> must stay "arbitrary"; flipping it
        # to "parallel" (megacore shard on v7x) would race the += on acc/out.
        compiler_params=pltpu.CompilerParams(dimension_semantics=("arbitrary",)),
    )(point_cls_preds, one_hot_targets, cls_weights.reshape(n, 1))
    return out[0, 0]


# ----------------------------------------------------------------------------
# Parameter construction (deterministic, synthetic), mirroring make_fc_layers
# ----------------------------------------------------------------------------
def make_fc_params(key, c_in, fc_cfg, c_out):
    """[Linear(no bias) -> BatchNorm1d -> ReLU] * len(fc_cfg) -> Linear(bias).

    BatchNorm1d is folded to per-channel scale/shift (inference semantics).
    """
    assert len(fc_cfg) == 2, "kernels are specialized for FC_CFG of length 2"
    ks = jax.random.split(key, 8)
    h1, h2 = fc_cfg
    eps = 1e-5

    def lin(k, ci, co):  # stored pre-transposed: (ci, co)
        return jax.random.normal(k, (ci, co), jnp.float32) * (1.0 / jnp.sqrt(ci))

    def bn_fold(kg, kb, c):
        gamma = 1.0 + 0.1 * jax.random.normal(kg, (1, c), jnp.float32)
        beta = 0.1 * jax.random.normal(kb, (1, c), jnp.float32)
        run_mean = 0.05 * jnp.arange(c, dtype=jnp.float32).reshape(1, c)
        run_var = jnp.ones((1, c), jnp.float32)
        scale = gamma / jnp.sqrt(run_var + eps)
        shift = beta - run_mean * scale
        return scale, shift

    w1 = lin(ks[0], c_in, h1)
    s1, b1 = bn_fold(ks[1], ks[2], h1)
    w2 = lin(ks[3], h1, h2)
    s2, b2 = bn_fold(ks[4], ks[5], h2)
    w3 = lin(ks[6], h2, c_out)
    b3 = 0.01 * jax.random.normal(ks[7], (1, c_out), jnp.float32)
    return dict(w1=w1, s1=s1, b1=b1, w2=w2, s2=s2, b2=b2, w3=w3, b3=b3)


def fuse_head_params(pa, pb, lane_pad=LANE):
    """Fuse two make_fc_layers heads (sharing the same input) into one kernel.

    W1 concatenated along outputs, W2/W3 block-diagonal (exact: off-diagonal
    zeros contribute nothing), final layer padded with zero columns up to a
    multiple of 128 lanes for lane-dense stores.  Matmul weights -> bf16 for
    the MXU; BN scale/shift and the final bias stay f32.
    """
    h1a, h1b = pa["w1"].shape[1], pb["w1"].shape[1]
    h2a, h2b = pa["w2"].shape[1], pb["w2"].shape[1]
    ca, cb = pa["w3"].shape[1], pb["w3"].shape[1]
    c_total = ca + cb
    c_pad = -(-c_total // lane_pad) * lane_pad

    w1 = jnp.concatenate([pa["w1"], pb["w1"]], axis=1)
    s1 = jnp.concatenate([pa["s1"], pb["s1"]], axis=1)
    b1 = jnp.concatenate([pa["b1"], pb["b1"]], axis=1)

    w2 = jnp.zeros((h1a + h1b, h2a + h2b), jnp.float32)
    w2 = w2.at[:h1a, :h2a].set(pa["w2"]).at[h1a:, h2a:].set(pb["w2"])
    s2 = jnp.concatenate([pa["s2"], pb["s2"]], axis=1)
    b2 = jnp.concatenate([pa["b2"], pb["b2"]], axis=1)

    w3 = jnp.zeros((h2a + h2b, c_pad), jnp.float32)
    w3 = w3.at[:h2a, :ca].set(pa["w3"]).at[h2a:, ca:c_total].set(pb["w3"])
    b3 = jnp.zeros((1, c_pad), jnp.float32)
    b3 = b3.at[:, :ca].set(pa["b3"]).at[:, ca:c_total].set(pb["b3"])

    return dict(
        w1=w1.astype(jnp.bfloat16), s1=s1, b1=b1,
        w2=w2.astype(jnp.bfloat16), s2=s2, b2=b2,
        w3=w3.astype(jnp.bfloat16), b3=b3,
        out_splits=(ca, cb),
    )


def fc_head_reference(x, p):
    """Pure-JAX reference for one head, same bf16-operand / f32-accumulate math."""
    h = jnp.dot(x.astype(jnp.bfloat16), p["w1"].astype(jnp.bfloat16),
                preferred_element_type=jnp.float32)
    h = jnp.maximum(h * p["s1"] + p["b1"], 0.0)
    h = jnp.dot(h.astype(jnp.bfloat16), p["w2"].astype(jnp.bfloat16),
                preferred_element_type=jnp.float32)
    h = jnp.maximum(h * p["s2"] + p["b2"], 0.0)
    return jnp.dot(h.astype(jnp.bfloat16), p["w3"].astype(jnp.bfloat16),
                   preferred_element_type=jnp.float32) + p["b3"]


# ----------------------------------------------------------------------------
if __name__ == "__main__":
    key = jax.random.PRNGKey(0)
    N, C_IN, NUM_CLASS, BOX_CODE = 256, 32, 3, 8
    FC_CFG = [32, 32]
    POINT_CLS_WEIGHT = 1.0

    k_feat, k_cls_p, k_box_p, k_lbl = jax.random.split(key, 4)
    point_features = jax.random.normal(k_feat, (N, C_IN), jnp.float32)

    # two heads built via make_fc_layers (cls head + box head), fused into one kernel
    cls_params = make_fc_params(k_cls_p, C_IN, FC_CFG, NUM_CLASS)
    box_params = make_fc_params(k_box_p, C_IN, FC_CFG, BOX_CODE)
    fused = fuse_head_params(cls_params, box_params)

    point_cls_preds, point_box_preds = fused_head_forward(point_features, fused)

    # --- get_cls_layer_loss: weights / one-hot glue in JAX, focal loss in-kernel
    point_cls_labels = jax.random.randint(k_lbl, (N,), -1, NUM_CLASS + 1)  # -1 ignore, 0 bg, >0 fg
    positives = point_cls_labels > 0
    negative_cls_weights = (point_cls_labels == 0).astype(jnp.float32)
    cls_weights = negative_cls_weights + positives.astype(jnp.float32)
    pos_normalizer = positives.sum().astype(jnp.float32)
    cls_weights = cls_weights / jnp.maximum(pos_normalizer, 1.0)
    oh_idx = point_cls_labels * (point_cls_labels >= 0)
    one_hot = jax.nn.one_hot(oh_idx, NUM_CLASS + 1, dtype=jnp.float32)[..., 1:]  # drop bg col

    point_loss_cls = focal_cls_loss(point_cls_preds, one_hot, cls_weights) * POINT_CLS_WEIGHT

    jax.block_until_ready((point_cls_preds, point_box_preds, point_loss_cls))

    # --- verify against pure-JAX references
    ref_cls = fc_head_reference(point_features, cls_params)
    ref_box = fc_head_reference(point_features, box_params)
    assert jnp.allclose(point_cls_preds, ref_cls, atol=1e-2, rtol=1e-2), \
        float(jnp.max(jnp.abs(point_cls_preds - ref_cls)))
    assert jnp.allclose(point_box_preds, ref_box, atol=1e-2, rtol=1e-2), \
        float(jnp.max(jnp.abs(point_box_preds - ref_box)))

    p = jax.nn.sigmoid(point_cls_preds)
    alpha_w = one_hot * 0.25 + (1 - one_hot) * 0.75
    pt = one_hot * (1 - p) + (1 - one_hot) * p
    bce = (jnp.maximum(point_cls_preds, 0.0) - point_cls_preds * one_hot
           + jnp.log1p(jnp.exp(-jnp.abs(point_cls_preds))))
    ref_loss = jnp.sum(alpha_w * pt * pt * bce * cls_weights[:, None]) * POINT_CLS_WEIGHT
    assert jnp.allclose(point_loss_cls, ref_loss, atol=5e-3, rtol=5e-3), \
        (float(point_loss_cls), float(ref_loss))

    print("KERNEL_OK")
</pallas_src>

<mosaic_0001>
module attributes {stable_mosaic.version = 11 : i64} {
  func.func @_fused_fc_head_kernel(%arg0: i32, %arg1: memref<128x32xf32, #tpu.memory_space<vmem>>, %arg2: memref<32x64xbf16, #tpu.memory_space<vmem>>, %arg3: memref<1x64xf32, #tpu.memory_space<vmem>>, %arg4: memref<1x64xf32, #tpu.memory_space<vmem>>, %arg5: memref<64x64xbf16, #tpu.memory_space<vmem>>, %arg6: memref<1x64xf32, #tpu.memory_space<vmem>>, %arg7: memref<1x64xf32, #tpu.memory_space<vmem>>, %arg8: memref<64x128xbf16, #tpu.memory_space<vmem>>, %arg9: memref<1x128xf32, #tpu.memory_space<vmem>>, %arg10: memref<128x128xf32, #tpu.memory_space<vmem>>) attributes {dimension_semantics = [#tpu.dimension_semantics<parallel>], iteration_bounds = array<i64: 2>, scalar_prefetch = 0 : i64, scratch_operands = 0 : i64, tpu.core_type = #tpu.core_type<tc>, window_params = [{transform_indices = @transform_0, window_bounds = array<i64: 128, 32>}, {pipeline_mode = #tpu.pipeline_mode<synchronous>, transform_indices = @transform_1, window_bounds = array<i64: 32, 64>}, {pipeline_mode = #tpu.pipeline_mode<synchronous>, transform_indices = @transform_2, window_bounds = array<i64: 1, 64>}, {pipeline_mode = #tpu.pipeline_mode<synchronous>, transform_indices = @transform_3, window_bounds = array<i64: 1, 64>}, {pipeline_mode = #tpu.pipeline_mode<synchronous>, transform_indices = @transform_4, window_bounds = array<i64: 64, 64>}, {pipeline_mode = #tpu.pipeline_mode<synchronous>, transform_indices = @transform_5, window_bounds = array<i64: 1, 64>}, {pipeline_mode = #tpu.pipeline_mode<synchronous>, transform_indices = @transform_6, window_bounds = array<i64: 1, 64>}, {pipeline_mode = #tpu.pipeline_mode<synchronous>, transform_indices = @transform_7, window_bounds = array<i64: 64, 128>}, {pipeline_mode = #tpu.pipeline_mode<synchronous>, transform_indices = @transform_8, window_bounds = array<i64: 1, 128>}, {transform_indices = @transform_9, window_bounds = array<i64: 128, 128>}]} {
    %c0 = arith.constant 0 : index
    %c0_0 = arith.constant 0 : index
    %0 = vector.load %arg1[%c0, %c0_0] : memref<128x32xf32, #tpu.memory_space<vmem>>, vector<128x32xf32>
    %1 = arith.truncf %0 : vector<128x32xf32> to vector<128x32xbf16>
    %c0_1 = arith.constant 0 : index
    %c0_2 = arith.constant 0 : index
    %2 = vector.load %arg2[%c0_1, %c0_2] : memref<32x64xbf16, #tpu.memory_space<vmem>>, vector<32x64xbf16>
    %cst = arith.constant dense<0.000000e+00> : vector<128x64xf32>
    %3 = tpu.matmul %1, %2, %cst {dimension_numbers = #tpu.dot_dimension_numbers<[1], [0], [0], [1], [0, 0, 1, 1], [], []>} : vector<128x32xbf16>, vector<32x64xbf16>, vector<128x64xf32> -> vector<128x64xf32>
    %c0_3 = arith.constant 0 : index
    %c0_4 = arith.constant 0 : index
    %4 = vector.load %arg3[%c0_3, %c0_4] : memref<1x64xf32, #tpu.memory_space<vmem>>, vector<1x64xf32>
    %5 = vector.broadcast %4 : vector<1x64xf32> to vector<128x64xf32>
    %6 = arith.mulf %3, %5 : vector<128x64xf32>
    %c0_5 = arith.constant 0 : index
    %c0_6 = arith.constant 0 : index
    %7 = vector.load %arg4[%c0_5, %c0_6] : memref<1x64xf32, #tpu.memory_space<vmem>>, vector<1x64xf32>
    %8 = vector.broadcast %7 : vector<1x64xf32> to vector<128x64xf32>
    %9 = arith.addf %6, %8 : vector<128x64xf32>
    %cst_7 = arith.constant 0.000000e+00 : f32
    %10 = vector.broadcast %cst_7 : f32 to vector<128x64xf32>
    %11 = arith.maximumf %9, %10 : vector<128x64xf32>
    %12 = arith.truncf %11 : vector<128x64xf32> to vector<128x64xbf16>
    %c0_8 = arith.constant 0 : index
    %c0_9 = arith.constant 0 : index
    %13 = vector.load %arg5[%c0_8, %c0_9] : memref<64x64xbf16, #tpu.memory_space<vmem>>, vector<64x64xbf16>
    %cst_10 = arith.constant dense<0.000000e+00> : vector<128x64xf32>
    %14 = tpu.matmul %12, %13, %cst_10 {dimension_numbers = #tpu.dot_dimension_numbers<[1], [0], [0], [1], [0, 0, 1, 1], [], []>} : vector<128x64xbf16>, vector<64x64xbf16>, vector<128x64xf32> -> vector<128x64xf32>
    %c0_11 = arith.constant 0 : index
    %c0_12 = arith.constant 0 : index
    %15 = vector.load %arg6[%c0_11, %c0_12] : memref<1x64xf32, #tpu.memory_space<vmem>>, vector<1x64xf32>
    %16 = vector.broadcast %15 : vector<1x64xf32> to vector<128x64xf32>
    %17 = arith.mulf %14, %16 : vector<128x64xf32>
    %c0_13 = arith.constant 0 : index
    %c0_14 = arith.constant 0 : index
    %18 = vector.load %arg7[%c0_13, %c0_14] : memref<1x64xf32, #tpu.memory_space<vmem>>, vector<1x64xf32>
    %19 = vector.broadcast %18 : vector<1x64xf32> to vector<128x64xf32>
    %20 = arith.addf %17, %19 : vector<128x64xf32>
    %cst_15 = arith.constant 0.000000e+00 : f32
    %21 = vector.broadcast %cst_15 : f32 to vector<128x64xf32>
    %22 = arith.maximumf %20, %21 : vector<128x64xf32>
    %23 = arith.truncf %22 : vector<128x64xf32> to vector<128x64xbf16>
    %c0_16 = arith.constant 0 : index
    %c0_17 = arith.constant 0 : index
    %24 = vector.load %arg8[%c0_16, %c0_17] : memref<64x128xbf16, #tpu.memory_space<vmem>>, vector<64x128xbf16>
    %cst_18 = arith.constant dense<0.000000e+00> : vector<128x128xf32>
    %25 = tpu.matmul %23, %24, %cst_18 {dimension_numbers = #tpu.dot_dimension_numbers<[1], [0], [0], [1], [0, 0, 1, 1], [], []>} : vector<128x64xbf16>, vector<64x128xbf16>, vector<128x128xf32> -> vector<128x128xf32>
    %c0_19 = arith.constant 0 : index
    %c0_20 = arith.constant 0 : index
    %26 = vector.load %arg9[%c0_19, %c0_20] : memref<1x128xf32, #tpu.memory_space<vmem>>, vector<1x128xf32>
    %27 = vector.broadcast %26 : vector<1x128xf32> to vector<128x128xf32>
    %28 = arith.addf %25, %27 : vector<128x128xf32>
    %c0_21 = arith.constant 0 : index
    %c0_22 = arith.constant 0 : index
    %29 = vector.load %arg10[%c0_21, %c0_22] : memref<128x128xf32, #tpu.memory_space<vmem>>, vector<128x128xf32>
    tpu.vector_store %arg10[%c0_21, %c0_22], %28 {strides = array<i32>} : memref<128x128xf32, #tpu.memory_space<vmem>>, vector<128x128xf32>,
    return
  }
  func.func @transform_0(%arg0: i32) -> (i32, i32) {
    %c0_i32 = arith.constant 0 : i32
    %c0_i32_0 = arith.constant 0 : i32
    return %arg0, %c0_i32 : i32, i32
  }
  func.func @transform_1(%arg0: i32) -> (i32, i32) {
    %c0_i32 = arith.constant 0 : i32
    %c0_i32_0 = arith.constant 0 : i32
    %c0_i32_1 = arith.constant 0 : i32
    return %c0_i32, %c0_i32_0 : i32, i32
  }
  func.func @transform_2(%arg0: i32) -> (i32, i32) {
    %c0_i32 = arith.constant 0 : i32
    %c0_i32_0 = arith.constant 0 : i32
    %c0_i32_1 = arith.constant 0 : i32
    return %c0_i32, %c0_i32_0 : i32, i32
  }
  func.func @transform_3(%arg0: i32) -> (i32, i32) {
    %c0_i32 = arith.constant 0 : i32
    %c0_i32_0 = arith.constant 0 : i32
    %c0_i32_1 = arith.constant 0 : i32
    return %c0_i32, %c0_i32_0 : i32, i32
  }
  func.func @transform_4(%arg0: i32) -> (i32, i32) {
    %c0_i32 = arith.constant 0 : i32
    %c0_i32_0 = arith.constant 0 : i32
    %c0_i32_1 = arith.constant 0 : i32
    return %c0_i32, %c0_i32_0 : i32, i32
  }
  func.func @transform_5(%arg0: i32) -> (i32, i32) {
    %c0_i32 = arith.constant 0 : i32
    %c0_i32_0 = arith.constant 0 : i32
    %c0_i32_1 = arith.constant 0 : i32
    return %c0_i32, %c0_i32_0 : i32, i32
  }
  func.func @transform_6(%arg0: i32) -> (i32, i32) {
    %c0_i32 = arith.constant 0 : i32
    %c0_i32_0 = arith.constant 0 : i32
    %c0_i32_1 = arith.constant 0 : i32
    return %c0_i32, %c0_i32_0 : i32, i32
  }
  func.func @transform_7(%arg0: i32) -> (i32, i32) {
    %c0_i32 = arith.constant 0 : i32
    %c0_i32_0 = arith.constant 0 : i32
    %c0_i32_1 = arith.constant 0 : i32
    return %c0_i32, %c0_i32_0 : i32, i32
  }
  func.func @transform_8(%arg0: i32) -> (i32, i32) {
    %c0_i32 = arith.constant 0 : i32
    %c0_i32_0 = arith.constant 0 : i32
    %c0_i32_1 = arith.constant 0 : i32
    return %c0_i32, %c0_i32_0 : i32, i32
  }
  func.func @transform_9(%arg0: i32) -> (i32, i32) {
    %c0_i32 = arith.constant 0 : i32
    %c0_i32_0 = arith.constant 0 : i32
    return %arg0, %c0_i32 : i32, i32
  }
}

</mosaic_0001>

<llo_original>
// kernel: tpu_custom_call.1
$region0: #{tpu_custom_call.1}
  #allocation0 [shape = 'u32[]', space=smem, size = 0x4, offset = 0x4, fixed_abs, tag = 'smem constant byte address 0x4 - core index']
  #allocation1 [shape = 'u32[72,128]{1,0:T(1,128)}', space=vmem, size = 0x9000, scoped, tag = 'internal scratch']
  %s0 = inlined_call_operand.vmem [shape: f32[256,32], index: 0, kind: input, shape index: {}]
  %s1 = inlined_call_operand.vmem [shape: bf16[32,64], index: 1, kind: input, shape index: {}]
  %s2 = inlined_call_operand.vmem [shape: f32[1,64], index: 2, kind: input, shape index: {}]
  %s3 = inlined_call_operand.vmem [shape: f32[1,64], index: 3, kind: input, shape index: {}]
  %s4 = inlined_call_operand.vmem [shape: bf16[64,64], index: 4, kind: input, shape index: {}]
  %s5 = inlined_call_operand.vmem [shape: f32[1,64], index: 5, kind: input, shape index: {}]
  %s6 = inlined_call_operand.vmem [shape: f32[1,64], index: 6, kind: input, shape index: {}]
  %s7 = inlined_call_operand.vmem [shape: bf16[64,128], index: 7, kind: input, shape index: {}]
  %s8 = inlined_call_operand.vmem [shape: f32[1,128], index: 8, kind: input, shape index: {}]
  %s9 = inlined_call_operand.hbm [shape: f32[256,128], index: 9, kind: output, shape index: {}]
  %s10 = sld [smem:[#allocation0]]
  $region69: #{tpu_custom_call.1} parent=0
    _
  %s12 = ssub.s32 1, %s10
  %s13 = scalar_select 0, %s12, %s10
  $region1: #{tpu_custom_call.1} parent=0
    #allocation2 [shape = 'u8[131072]{0}', space=vmem, size = 0x20000, scoped, tag = 'output window, operand 0']
    #allocation3 [shape = 's32[2]{0}', space=sflag, size = 0x8, scoped, tag = 'scoped memory for tpu_custom_call.1']
    %14 = vsyncpa [#allocation3], 0
    %s15 = scalar_lea.sflag [#allocation3], 1
    %16 = vsyncpa %s15, 0
    loop: start=0, step=1, limit=4
    $region2: #{tpu_custom_call.1} parent=1 // loop_pre_header
      _
    $region3: #{tpu_custom_call.1} parent=1 // loop_header
      %s18 = sphi 0, %s22
      %p19 = scmp.ge.s32.totalorder %s18, 4
      %s28 = sphi 0, %s30
      %s31 = sphi 0, %s28
      %s32 = sphi 0, %s31
      %s48 = sphi 0, %s32
      %s52 = sphi 0, %s52
      %s54 = sphi 0, %s52
      %s55 = sphi 0, %s54
      %s69 = sphi 0, %s55
      %s73 = sphi 0, %s73
      %s75 = sphi 0, %s73
      %s76 = sphi 0, %s75
      %s90 = sphi 0, %s76
      %s94 = sphi 0, %s94
      %s96 = sphi 0, %s94
      %s97 = sphi 0, %s96
      %s111 = sphi 0, %s97
      %s115 = sphi 0, %s115
      %s117 = sphi 0, %s115
      %s118 = sphi 0, %s117
      %s132 = sphi 0, %s118
      %s136 = sphi 0, %s136
      %s138 = sphi 0, %s136
      %s139 = sphi 0, %s138
      %s153 = sphi 0, %s139
      %s157 = sphi 0, %s157
      %s159 = sphi 0, %s157
      %s160 = sphi 0, %s159
      %s174 = sphi 0, %s160
      %s178 = sphi 0, %s178
      %s180 = sphi 0, %s178
      %s181 = sphi 0, %s180
      %s195 = sphi 0, %s181
      %s199 = sphi 0, %s199
      %s201 = sphi 0, %s199
      %s202 = sphi 0, %s201
      %s216 = sphi 0, %s202
      %s222 = sphi 0, %s224
      %s225 = sphi 0, %s222
      %s226 = sphi 0, %s225
      %s242 = sphi 0, %s226
    $region4: #{tpu_custom_call.1} parent=1 // loop_header_branch
      %21 = sbr.rel (%p19) target = $region8
    $region5: #{tpu_custom_call.1} parent=1 // loop_body
      %s23 = ssub.s32 %s18, 1
      %s24 = ssub.s32 %s18, 2
      %s25 = sadd.s32 %s18, 1
      %s26 = ssub.s32 %s18, %s25
      %p27 = scmp.eq.s32.totalorder %s26, 0
      %s29 = sadd.s32 %s28, 1
      %s30 = scalar_select %p27, %s28, %s29
      %p33 = pneg %p27
      %p34 = scmp.eq.s32.totalorder %s18, 1
      %p35 = por %p33, %p34
      %p36 = scmp.ne.s32.totalorder %s28, %s31
      %p37 = scmp.eq.s32.totalorder %s18, 0
      %p38 = por %p36, %p37
      %p39 = scmp.ne.s32.totalorder %s28, %s31
      %p40 = scmp.eq.s32.totalorder %s23, 1
      %p41 = por %p39, %p40
      %p42 = scmp.ne.s32.totalorder %s31, %s32
      %p43 = scmp.eq.s32.totalorder %s23, 0
      %p44 = por %p42, %p43
      %p45 = scmp.ne.s32.totalorder %s31, %s32
      %p46 = scmp.eq.s32.totalorder %s24, 1
      %p47 = por %p45, %p46
      %p49 = scmp.ne.s32.totalorder %s32, %s48
      %p50 = scmp.eq.s32.totalorder %s24, 0
      %p51 = por %p49, %p50
      %s53 = sadd.s32 %s52, 1
      %p56 = scmp.eq.s32.totalorder %s18, 1
      %p57 = scmp.ne.s32.totalorder %s52, %s54
      %p58 = scmp.eq.s32.totalorder %s18, 0
      %p59 = por %p57, %p58
      %p60 = scmp.ne.s32.totalorder %s52, %s54
      %p61 = scmp.eq.s32.totalorder %s23, 1
      %p62 = por %p60, %p61
      %p63 = scmp.ne.s32.totalorder %s54, %s55
      %p64 = scmp.eq.s32.totalorder %s23, 0
      %p65 = por %p63, %p64
      %p66 = scmp.ne.s32.totalorder %s54, %s55
      %p67 = scmp.eq.s32.totalorder %s24, 1
      %p68 = por %p66, %p67
      %p70 = scmp.ne.s32.totalorder %s55, %s69
      %p71 = scmp.eq.s32.totalorder %s24, 0
      %p72 = por %p70, %p71
      %s74 = sadd.s32 %s73, 1
      %p77 = scmp.eq.s32.totalorder %s18, 1
      %p78 = scmp.ne.s32.totalorder %s73, %s75
      %p79 = scmp.eq.s32.totalorder %s18, 0
      %p80 = por %p78, %p79
      %p81 = scmp.ne.s32.totalorder %s73, %s75
      %p82 = scmp.eq.s32.totalorder %s23, 1
      %p83 = por %p81, %p82
      %p84 = scmp.ne.s32.totalorder %s75, %s76
      %p85 = scmp.eq.s32.totalorder %s23, 0
      %p86 = por %p84, %p85
      %p87 = scmp.ne.s32.totalorder %s75, %s76
      %p88 = scmp.eq.s32.totalorder %s24, 1
      %p89 = por %p87, %p88
      %p91 = scmp.ne.s32.totalorder %s76, %s90
      %p92 = scmp.eq.s32.totalorder %s24, 0
      %p93 = por %p91, %p92
      %s95 = sadd.s32 %s94, 1
      %p98 = scmp.eq.s32.totalorder %s18, 1
      %p99 = scmp.ne.s32.totalorder %s94, %s96
      %p100 = scmp.eq.s32.totalorder %s18, 0
      %p101 = por %p99, %p100
      %p102 = scmp.ne.s32.totalorder %s94, %s96
      %p103 = scmp.eq.s32.totalorder %s23, 1
      %p104 = por %p102, %p103
      %p105 = scmp.ne.s32.totalorder %s96, %s97
      %p106 = scmp.eq.s32.totalorder %s23, 0
      %p107 = por %p105, %p106
      %p108 = scmp.ne.s32.totalorder %s96, %s97
      %p109 = scmp.eq.s32.totalorder %s24, 1
      %p110 = por %p108, %p109
      %p112 = scmp.ne.s32.totalorder %s97, %s111
      %p113 = scmp.eq.s32.totalorder %s24, 0
      %p114 = por %p112, %p113
      %s116 = sadd.s32 %s115, 1
      %p119 = scmp.eq.s32.totalorder %s18, 1
      %p120 = scmp.ne.s32.totalorder %s115, %s117
      %p121 = scmp.eq.s32.totalorder %s18, 0
      %p122 = por %p120, %p121
      %p123 = scmp.ne.s32.totalorder %s115, %s117
      %p124 = scmp.eq.s32.totalorder %s23, 1
      %p125 = por %p123, %p124
      %p126 = scmp.ne.s32.totalorder %s117, %s118
      %p127 = scmp.eq.s32.totalorder %s23, 0
      %p128 = por %p126, %p127
      %p129 = scmp.ne.s32.totalorder %s117, %s118
      %p130 = scmp.eq.s32.totalorder %s24, 1
      %p131 = por %p129, %p130
      %p133 = scmp.ne.s32.totalorder %s118, %s132
      %p134 = scmp.eq.s32.totalorder %s24, 0
      %p135 = por %p133, %p134
      %s137 = sadd.s32 %s136, 1
      %p140 = scmp.eq.s32.totalorder %s18, 1
      %p141 = scmp.ne.s32.totalorder %s136, %s138
      %p142 = scmp.eq.s32.totalorder %s18, 0
      %p143 = por %p141, %p142
      %p144 = scmp.ne.s32.totalorder %s136, %s138
      %p145 = scmp.eq.s32.totalorder %s23, 1
      %p146 = por %p144, %p145
      %p147 = scmp.ne.s32.totalorder %s138, %s139
      %p148 = scmp.eq.s32.totalorder %s23, 0
      %p149 = por %p147, %p148
      %p150 = scmp.ne.s32.totalorder %s138, %s139
      %p151 = scmp.eq.s32.totalorder %s24, 1
      %p152 = por %p150, %p151
      %p154 = scmp.ne.s32.totalorder %s139, %s153
      %p155 = scmp.eq.s32.totalorder %s24, 0
      %p156 = por %p154, %p155
      %s158 = sadd.s32 %s157, 1
      %p161 = scmp.eq.s32.totalorder %s18, 1
      %p162 = scmp.ne.s32.totalorder %s157, %s159
      %p163 = scmp.eq.s32.totalorder %s18, 0
      %p164 = por %p162, %p163
      %p165 = scmp.ne.s32.totalorder %s157, %s159
      %p166 = scmp.eq.s32.totalorder %s23, 1
      %p167 = por %p165, %p166
      %p168 = scmp.ne.s32.totalorder %s159, %s160
      %p169 = scmp.eq.s32.totalorder %s23, 0
      %p170 = por %p168, %p169
      %p171 = scmp.ne.s32.totalorder %s159, %s160
      %p172 = scmp.eq.s32.totalorder %s24, 1
      %p173 = por %p171, %p172
      %p175 = scmp.ne.s32.totalorder %s160, %s174
      %p176 = scmp.eq.s32.totalorder %s24, 0
      %p177 = por %p175, %p176
      %s179 = sadd.s32 %s178, 1
      %p182 = scmp.eq.s32.totalorder %s18, 1
      %p183 = scmp.ne.s32.totalorder %s178, %s180
      %p184 = scmp.eq.s32.totalorder %s18, 0
      %p185 = por %p183, %p184
      %p186 = scmp.ne.s32.totalorder %s178, %s180
      %p187 = scmp.eq.s32.totalorder %s23, 1
      %p188 = por %p186, %p187
      %p189 = scmp.ne.s32.totalorder %s180, %s181
      %p190 = scmp.eq.s32.totalorder %s23, 0
      %p191 = por %p189, %p190
      %p192 = scmp.ne.s32.totalorder %s180, %s181
      %p193 = scmp.eq.s32.totalorder %s24, 1
      %p194 = por %p192, %p193
      %p196 = scmp.ne.s32.totalorder %s181, %s195
      %p197 = scmp.eq.s32.totalorder %s24, 0
      %p198 = por %p196, %p197
      %s200 = sadd.s32 %s199, 1
      %p203 = scmp.eq.s32.totalorder %s18, 1
      %p204 = scmp.ne.s32.totalorder %s199, %s201
      %p205 = scmp.eq.s32.totalorder %s18, 0
      %p206 = por %p204, %p205
      %p207 = scmp.ne.s32.totalorder %s199, %s201
      %p208 = scmp.eq.s32.totalorder %s23, 1
      %p209 = por %p207, %p208
      %p210 = scmp.ne.s32.totalorder %s201, %s202
      %p211 = scmp.eq.s32.totalorder %s23, 0
      %p212 = por %p210, %p211
      %p213 = scmp.ne.s32.totalorder %s201, %s202
      %p214 = scmp.eq.s32.totalorder %s24, 1
      %p215 = por %p213, %p214
      %p217 = scmp.ne.s32.totalorder %s202, %s216
      %p218 = scmp.eq.s32.totalorder %s24, 0
      %p219 = por %p217, %p218
      %s220 = ssub.s32 %s18, %s25
      %p221 = scmp.eq.s32.totalorder %s220, 0
      %s223 = sadd.s32 %s222, 1
      %s224 = scalar_select %p221, %s222, %s223
      %p227 = pneg %p221
      %p228 = scmp.eq.s32.totalorder %s18, 1
      %p229 = por %p227, %p228
      %p230 = scmp.ne.s32.totalorder %s222, %s225
      %p231 = scmp.eq.s32.totalorder %s18, 0
      %p232 = por %p230, %p231
      %p233 = scmp.ne.s32.totalorder %s222, %s225
      %p234 = scmp.eq.s32.totalorder %s23, 1
      %p235 = por %p233, %p234
      %p236 = scmp.ne.s32.totalorder %s225, %s226
      %p237 = scmp.eq.s32.totalorder %s23, 0
      %p238 = por %p236, %p237
      %p239 = scmp.ne.s32.totalorder %s225, %s226
      %p240 = scmp.eq.s32.totalorder %s24, 1
      %p241 = por %p239, %p240
      %p243 = scmp.ne.s32.totalorder %s226, %s242
      %p244 = scmp.eq.s32.totalorder %s24, 0
      %p245 = por %p243, %p244
      %p246 = scmp.le.s32.totalorder 1, %s18
      %p247 = scmp.lt.s32.totalorder %s18, 3
      %p248 = pnand %p246, %p247
      %p249 = pneg %p248
      // Predicated region
      $region9: #{tpu_custom_call.1} parent=5 // pred_check
        _
      $region10: #{tpu_custom_call.1} parent=5 // pred_check_branch
        %251 = sbr.rel (%p248) target = $region12
      $region11: #{tpu_custom_call.1} parent=5 // pred_region
        %s252 = ssub.s32 %s18, 1
        // Predicated region
        $region13: #{tpu_custom_call.1} parent=11 // pred_check
          %p253 = pneg %p65
        $region14: #{tpu_custom_call.1} parent=11 // pred_check_branch
          %255 = sbr.rel (%p253) target = $region16
        $region15: #{tpu_custom_call.1} parent=11 // pred_region
          _
        $region16: #{tpu_custom_call.1} parent=11 // pred_fallthru
          _
        // Predicated region
        $region17: #{tpu_custom_call.1} parent=11 // pred_check
          %p256 = pneg %p86
        $region18: #{tpu_custom_call.1} parent=11 // pred_check_branch
          %258 = sbr.rel (%p256) target = $region20
        $region19: #{tpu_custom_call.1} parent=11 // pred_region
          _
        $region20: #{tpu_custom_call.1} parent=11 // pred_fallthru
          _
        // Predicated region
        $region21: #{tpu_custom_call.1} parent=11 // pred_check
          %p259 = pneg %p107
        $region22: #{tpu_custom_call.1} parent=11 // pred_check_branch
          %261 = sbr.rel (%p259) target = $region24
        $region23: #{tpu_custom_call.1} parent=11 // pred_region
          _
        $region24: #{tpu_custom_call.1} parent=11 // pred_fallthru
          _
        // Predicated region
        $region25: #{tpu_custom_call.1} parent=11 // pred_check
          %p262 = pneg %p128
        $region26: #{tpu_custom_call.1} parent=11 // pred_check_branch
          %264 = sbr.rel (%p262) target = $region28
        $region27: #{tpu_custom_call.1} parent=11 // pred_region
          _
        $region28: #{tpu_custom_call.1} parent=11 // pred_fallthru
          _
        // Predicated region
        $region29: #{tpu_custom_call.1} parent=11 // pred_check
          %p265 = pneg %p149
        $region30: #{tpu_custom_call.1} parent=11 // pred_check_branch
          %267 = sbr.rel (%p265) target = $region32
        $region31: #{tpu_custom_call.1} parent=11 // pred_region
          _
        $region32: #{tpu_custom_call.1} parent=11 // pred_fallthru
          _
        // Predicated region
        $region33: #{tpu_custom_call.1} parent=11 // pred_check
          %p268 = pneg %p170
        $region34: #{tpu_custom_call.1} parent=11 // pred_check_branch
          %270 = sbr.rel (%p268) target = $region36
        $region35: #{tpu_custom_call.1} parent=11 // pred_region
          _
        $region36: #{tpu_custom_call.1} parent=11 // pred_fallthru
          _
        // Predicated region
        $region37: #{tpu_custom_call.1} parent=11 // pred_check
          %p271 = pneg %p191
        $region38: #{tpu_custom_call.1} parent=11 // pred_check_branch
          %273 = sbr.rel (%p271) target = $region40
        $region39: #{tpu_custom_call.1} parent=11 // pred_region
          _
        $region40: #{tpu_custom_call.1} parent=11 // pred_fallthru
          _
        // Predicated region
        $region41: #{tpu_custom_call.1} parent=11 // pred_check
          %p274 = pneg %p212
        $region42: #{tpu_custom_call.1} parent=11 // pred_check_branch
          %276 = sbr.rel (%p274) target = $region44
        $region43: #{tpu_custom_call.1} parent=11 // pred_region
          _
        $region44: #{tpu_custom_call.1} parent=11 // pred_fallthru
          _
      $region12: #{tpu_custom_call.1} parent=5 // pred_fallthru
        _
      %p277 = scmp.lt.s32.totalorder %s18, 2
      // Predicated region
      $region45: #{tpu_custom_call.1} parent=5 // pred_check
        %p278 = pneg %p277
      $region46: #{tpu_custom_call.1} parent=5 // pred_check_branch
        %280 = sbr.rel (%p278) target = $region48
      $region47: #{tpu_custom_call.1} parent=5 // pred_region
        // Predicated region
        $region49: #{tpu_custom_call.1} parent=47 // pred_check
          %p281 = pneg %p38
        $region50: #{tpu_custom_call.1} parent=47 // pred_check_branch
          %283 = sbr.rel (%p281) target = $region52
        $region51: #{tpu_custom_call.1} parent=47 // pred_region
          %s284 = smul.u32 16, %s18
          %p285 = scmp.lt.s32.totalorder %s284, 31
          %s286 = scalar_select %p285, %s284, 31
          %s287 = smul.addr %s286, 8
          %s288 = scalar_lea.vmem %s0, %s287
          %s289 = smul.u32 16, %s18
        $region52: #{tpu_custom_call.1} parent=47 // pred_fallthru
          _
      $region48: #{tpu_custom_call.1} parent=5 // pred_fallthru
        _
      %p290 = scmp.le.s32.totalorder 1, %s18
      %p291 = scmp.lt.s32.totalorder %s18, 3
      %p292 = pnand %p290, %p291
      %p293 = pneg %p292
      // Predicated region
      $region53: #{tpu_custom_call.1} parent=5 // pred_check
        _
      $region54: #{tpu_custom_call.1} parent=5 // pred_check_branch
        %295 = sbr.rel (%p292) target = $region56
      $region55: #{tpu_custom_call.1} parent=5 // pred_region
        %s296 = ssub.s32 %s18, 1
        %s297 = smul.u32 16, %s23
        %p298 = scmp.lt.s32.totalorder %s297, 31
        %s299 = scalar_select %p298, %s297, 31
        %s300 = smul.addr %s299, 8
        %s301 = scalar_lea.vmem %s0, %s300
        %p302 = pneg %p44
        %p303 = pneg %p41
        %p304 = pneg %p65
        %p305 = pneg %p62
        %p306 = pneg %p86
        %p307 = pneg %p83
        %p308 = pneg %p107
        %p309 = pneg %p104
        %p310 = pneg %p128
        %p311 = pneg %p125
        %p312 = pneg %p149
        %p313 = pneg %p146
        %p314 = pneg %p170
        %p315 = pneg %p167
        %p316 = pneg %p191
        %p317 = pneg %p188
        %p318 = pneg %p212
        %p319 = pneg %p209
        %p320 = pneg %p238
        %p321 = pneg %p235
        %s322 = sand.u32 %s225, 1
        %s323 = scalar_lea.sflag [#allocation3], %s322
        %s324 = sand.u32 %s225, 1
        %s325 = smul.addr %s324, 128
        %s326 = scalar_lea.vmem [#allocation2], %s325
        %s327 = smul.u32 16, %s23
        %p328 = scmp.lt.s32.totalorder %s327, 31
        %s329 = scalar_select %p328, %s327, 31
        %s330 = smul.addr %s329, 8
        %s331 = scalar_lea.vmem %s0, %s330
        %s332 = smul.u32 16, %s23
        %s333 = smul.u32 16, %s23
        %v335 = vld [vmem:[%s331] sm:$0xff]
        %v336 = vld [vmem:[%s331 + $0x8] sm:$0xff]
        %v337 = vld [vmem:[%s331 + $0x10] sm:$0xff]
        %v338 = vld [vmem:[%s331 + $0x18] sm:$0xff]
        %v339 = vld [vmem:[%s331 + $0x20] sm:$0xff]
        %v340 = vld [vmem:[%s331 + $0x28] sm:$0xff]
        %v341 = vld [vmem:[%s331 + $0x30] sm:$0xff]
        %v342 = vld [vmem:[%s331 + $0x38] sm:$0xff]
        %v343 = vld [vmem:[%s331 + $0x40] sm:$0xff]
        %v344 = vld [vmem:[%s331 + $0x48] sm:$0xff]
        %v345 = vld [vmem:[%s331 + $0x50] sm:$0xff]
        %v346 = vld [vmem:[%s331 + $0x58] sm:$0xff]
        %v347 = vld [vmem:[%s331 + $0x60] sm:$0xff]
        %v348 = vld [vmem:[%s331 + $0x68] sm:$0xff]
        %v349 = vld [vmem:[%s331 + $0x70] sm:$0xff]
        %v350 = vld [vmem:[%s331 + $0x78] sm:$0xff]
        %v351 = vpack.c.bf16 %v336, %v335
        %v352 = vpack.c.bf16 %v338, %v337
        %v353 = vpack.c.bf16 %v340, %v339
        %v354 = vpack.c.bf16 %v342, %v341
        %v355 = vpack.c.bf16 %v344, %v343
        %v356 = vpack.c.bf16 %v346, %v345
        %v357 = vpack.c.bf16 %v348, %v347
        %v358 = vpack.c.bf16 %v350, %v349
        %v359 = vld [vmem:[%s1] sm:$0xf]
        %v360 = vld [vmem:[%s1 + $0x4] sm:$0xf]
        %v361 = vld [vmem:[%s1 + $0x8] sm:$0xf]
        %v362 = vld [vmem:[%s1 + $0xc] sm:$0xf]
        %v367 = vunpack.c.l.b16 %v359
        %v368 = vunpack.c.l.b16 %v360
        %v369 = vunpack.c.l.b16 %v361
        %v370 = vunpack.c.l.b16 %v362
        %v371 = vpack.c.b16 %v368, %v367
        %v372 = vpack.c.b16 %v370, %v369
        %vm375 = vcmask 261120
        %v377 = vsel %vm375, %v351, 0
        %v380 = vsel %vm375, %v352, 0
        %v383 = vsel %vm375, %v353, 0
        %v386 = vsel %vm375, %v354, 0
        %v389 = vsel %vm375, %v355, 0
        %v392 = vsel %vm375, %v356, 0
        %v395 = vsel %vm375, %v357, 0
        %v398 = vsel %vm375, %v358, 0
        %400 = vmatpush.bf16.msra.mxu0 0
        %401 = vmatpush.bf16.msra.mxu0 0
        %402 = vmatpush.bf16.msra.mxu0 0
        %403 = vmatpush.bf16.msra.mxu0 0
        %404 = vmatpush.bf16.msra.mxu0 0
        %405 = vmatpush.bf16.msra.mxu0 0
        %406 = vmatpush.bf16.msra.mxu0 %v372
        %407 = vmatpush.bf16.msra.mxu0 %v371
        %408 = vmatmul.bf16.gmra.mxu0 %v377
        %v409 = vpop.f32.mrf.mxu0
        %v410 = vadd.f32 0.0, %v409
        %v411 = vpop.f32.mrf.mxu0
        %v412 = vadd.f32 0.0, %v411
        %413 = vmatmul.bf16.gmra.mxu0 %v380
        %v414 = vpop.f32.mrf.mxu0
        %v415 = vadd.f32 0.0, %v414
        %v416 = vpop.f32.mrf.mxu0
        %v417 = vadd.f32 0.0, %v416
        %418 = vmatmul.bf16.gmra.mxu0 %v383
        %v419 = vpop.f32.mrf.mxu0
        %v420 = vadd.f32 0.0, %v419
        %v421 = vpop.f32.mrf.mxu0
        %v422 = vadd.f32 0.0, %v421
        %423 = vmatmul.bf16.gmra.mxu0 %v386
        %v424 = vpop.f32.mrf.mxu0
        %v425 = vadd.f32 0.0, %v424
        %v426 = vpop.f32.mrf.mxu0
        %v427 = vadd.f32 0.0, %v426
        %428 = vmatmul.bf16.gmra.mxu0 %v389
        %v429 = vpop.f32.mrf.mxu0
        %v430 = vadd.f32 0.0, %v429
        %v431 = vpop.f32.mrf.mxu0
        %v432 = vadd.f32 0.0, %v431
        %433 = vmatmul.bf16.gmra.mxu0 %v392
        %v434 = vpop.f32.mrf.mxu0
        %v435 = vadd.f32 0.0, %v434
        %v436 = vpop.f32.mrf.mxu0
        %v437 = vadd.f32 0.0, %v436
        %438 = vmatmul.bf16.gmra.mxu0 %v395
        %v439 = vpop.f32.mrf.mxu0
        %v440 = vadd.f32 0.0, %v439
        %v441 = vpop.f32.mrf.mxu0
        %v442 = vadd.f32 0.0, %v441
        %443 = vmatmul.bf16.gmra.mxu0 %v398
        %v444 = vpop.f32.mrf.mxu0
        %v445 = vadd.f32 0.0, %v444
        %v446 = vpop.f32.mrf.mxu0
        %v447 = vadd.f32 0.0, %v446
        %448 = vdwg.mxu0
        %v449 = vld [vmem:[%s2] sm:$0x1]
        %v451 = vperm.slane %v449, 0
        %v453 = vmul.f32 %v410, %v451
        %v454 = vmul.f32 %v412, %v451
        %v455 = vmul.f32 %v415, %v451
        %v456 = vmul.f32 %v417, %v451
        %v457 = vmul.f32 %v420, %v451
        %v458 = vmul.f32 %v422, %v451
        %v459 = vmul.f32 %v425, %v451
        %v460 = vmul.f32 %v427, %v451
        %v461 = vmul.f32 %v430, %v451
        %v462 = vmul.f32 %v432, %v451
        %v463 = vmul.f32 %v435, %v451
        %v464 = vmul.f32 %v437, %v451
        %v465 = vmul.f32 %v440, %v451
        %v466 = vmul.f32 %v442, %v451
        %v467 = vmul.f32 %v445, %v451
        %v468 = vmul.f32 %v447, %v451
        %v469 = vld [vmem:[%s3] sm:$0x1]
        %v471 = vperm.slane %v469, 0
        %v473 = vadd.f32 %v453, %v471
        %v474 = vadd.f32 %v454, %v471
        %v475 = vadd.f32 %v455, %v471
        %v476 = vadd.f32 %v456, %v471
        %v477 = vadd.f32 %v457, %v471
        %v478 = vadd.f32 %v458, %v471
        %v479 = vadd.f32 %v459, %v471
        %v480 = vadd.f32 %v460, %v471
        %v481 = vadd.f32 %v461, %v471
        %v482 = vadd.f32 %v462, %v471
        %v483 = vadd.f32 %v463, %v471
        %v484 = vadd.f32 %v464, %v471
        %v485 = vadd.f32 %v465, %v471
        %v486 = vadd.f32 %v466, %v471
        %v487 = vadd.f32 %v467, %v471
        %v488 = vadd.f32 %v468, %v471
        %v489 = vmax.f32 %v473, 0.0
        %v490 = vmax.f32 %v474, 0.0
        %v491 = vmax.f32 %v475, 0.0
        %v492 = vmax.f32 %v476, 0.0
        %v493 = vmax.f32 %v477, 0.0
        %v494 = vmax.f32 %v478, 0.0
        %v495 = vmax.f32 %v479, 0.0
        %v496 = vmax.f32 %v480, 0.0
        %v497 = vmax.f32 %v481, 0.0
        %v498 = vmax.f32 %v482, 0.0
        %v499 = vmax.f32 %v483, 0.0
        %v500 = vmax.f32 %v484, 0.0
        %v501 = vmax.f32 %v485, 0.0
        %v502 = vmax.f32 %v486, 0.0
        %v503 = vmax.f32 %v487, 0.0
        %v504 = vmax.f32 %v488, 0.0
        %v505 = vpack.c.bf16 %v490, %v489
        %v506 = vpack.c.bf16 %v492, %v491
        %v507 = vpack.c.bf16 %v494, %v493
        %v508 = vpack.c.bf16 %v496, %v495
        %v509 = vpack.c.bf16 %v498, %v497
        %v510 = vpack.c.bf16 %v500, %v499
        %v511 = vpack.c.bf16 %v502, %v501
        %v512 = vpack.c.bf16 %v504, %v503
        %v513 = vld [vmem:[%s4] sm:$0xf]
        %v514 = vld [vmem:[%s4 + $0x4] sm:$0xf]
        %v515 = vld [vmem:[%s4 + $0x8] sm:$0xf]
        %v516 = vld [vmem:[%s4 + $0xc] sm:$0xf]
        %v517 = vld [vmem:[%s4 + $0x10] sm:$0xf]
        %v518 = vld [vmem:[%s4 + $0x14] sm:$0xf]
        %v519 = vld [vmem:[%s4 + $0x18] sm:$0xf]
        %v520 = vld [vmem:[%s4 + $0x1c] sm:$0xf]
        %v529 = vunpack.c.l.b16 %v513
        %v530 = vunpack.c.l.b16 %v514
        %v531 = vunpack.c.l.b16 %v515
        %v532 = vunpack.c.l.b16 %v516
        %v533 = vunpack.c.l.b16 %v517
        %v534 = vunpack.c.l.b16 %v518
        %v535 = vunpack.c.l.b16 %v519
        %v536 = vunpack.c.l.b16 %v520
        %v537 = vpack.c.b16 %v530, %v529
        %v538 = vpack.c.b16 %v532, %v531
        %v539 = vpack.c.b16 %v534, %v533
        %v540 = vpack.c.b16 %v536, %v535
        %vm545 = vcmask 523264
        %v547 = vsel %vm545, %v505, 0
        %v550 = vsel %vm545, %v506, 0
        %v553 = vsel %vm545, %v507, 0
        %v556 = vsel %vm545, %v508, 0
        %v559 = vsel %vm545, %v509, 0
        %v562 = vsel %vm545, %v510, 0
        %v565 = vsel %vm545, %v511, 0
        %v568 = vsel %vm545, %v512, 0
        %570 = vmatpush.bf16.msra.mxu0 0
        %571 = vmatpush.bf16.msra.mxu0 0
        %572 = vmatpush.bf16.msra.mxu0 0
        %573 = vmatpush.bf16.msra.mxu0 0
        %574 = vmatpush.bf16.msra.mxu0 %v540
        %575 = vmatpush.bf16.msra.mxu0 %v539
        %576 = vmatpush.bf16.msra.mxu0 %v538
        %577 = vmatpush.bf16.msra.mxu0 %v537
        %578 = vmatmul.bf16.gmra.mxu0 %v547
        %v579 = vpop.f32.mrf.mxu0
        %v580 = vadd.f32 0.0, %v579
        %v581 = vpop.f32.mrf.mxu0
        %v582 = vadd.f32 0.0, %v581
        %583 = vmatmul.bf16.gmra.mxu0 %v550
        %v584 = vpop.f32.mrf.mxu0
        %v585 = vadd.f32 0.0, %v584
        %v586 = vpop.f32.mrf.mxu0
        %v587 = vadd.f32 0.0, %v586
        %588 = vmatmul.bf16.gmra.mxu0 %v553
        %v589 = vpop.f32.mrf.mxu0
        %v590 = vadd.f32 0.0, %v589
        %v591 = vpop.f32.mrf.mxu0
        %v592 = vadd.f32 0.0, %v591
        %593 = vmatmul.bf16.gmra.mxu0 %v556
        %v594 = vpop.f32.mrf.mxu0
        %v595 = vadd.f32 0.0, %v594
        %v596 = vpop.f32.mrf.mxu0
        %v597 = vadd.f32 0.0, %v596
        %598 = vmatmul.bf16.gmra.mxu0 %v559
        %v599 = vpop.f32.mrf.mxu0
        %v600 = vadd.f32 0.0, %v599
        %v601 = vpop.f32.mrf.mxu0
        %v602 = vadd.f32 0.0, %v601
        %603 = vmatmul.bf16.gmra.mxu0 %v562
        %v604 = vpop.f32.mrf.mxu0
        %v605 = vadd.f32 0.0, %v604
        %v606 = vpop.f32.mrf.mxu0
        %v607 = vadd.f32 0.0, %v606
        %608 = vmatmul.bf16.gmra.mxu0 %v565
        %v609 = vpop.f32.mrf.mxu0
        %v610 = vadd.f32 0.0, %v609
        %v611 = vpop.f32.mrf.mxu0
        %v612 = vadd.f32 0.0, %v611
        %613 = vmatmul.bf16.gmra.mxu0 %v568
        %v614 = vpop.f32.mrf.mxu0
        %v615 = vadd.f32 0.0, %v614
        %v616 = vpop.f32.mrf.mxu0
        %v617 = vadd.f32 0.0, %v616
        %618 = vdwg.mxu0
        %v619 = vld [vmem:[%s5] sm:$0x1]
        %v621 = vperm.slane %v619, 0
        %v623 = vmul.f32 %v580, %v621
        %v624 = vmul.f32 %v582, %v621
        %v625 = vmul.f32 %v585, %v621
        %v626 = vmul.f32 %v587, %v621
        %v627 = vmul.f32 %v590, %v621
        %v628 = vmul.f32 %v592, %v621
        %v629 = vmul.f32 %v595, %v621
        %v630 = vmul.f32 %v597, %v621
        %v631 = vmul.f32 %v600, %v621
        %v632 = vmul.f32 %v602, %v621
        %v633 = vmul.f32 %v605, %v621
        %v634 = vmul.f32 %v607, %v621
        %v635 = vmul.f32 %v610, %v621
        %v636 = vmul.f32 %v612, %v621
        %v637 = vmul.f32 %v615, %v621
        %v638 = vmul.f32 %v617, %v621
        %v639 = vld [vmem:[%s6] sm:$0x1]
        %v641 = vperm.slane %v639, 0
        %v643 = vadd.f32 %v623, %v641
        %v644 = vadd.f32 %v624, %v641
        %v645 = vadd.f32 %v625, %v641
        %v646 = vadd.f32 %v626, %v641
        %v647 = vadd.f32 %v627, %v641
        %v648 = vadd.f32 %v628, %v641
        %v649 = vadd.f32 %v629, %v641
        %v650 = vadd.f32 %v630, %v641
        %v651 = vadd.f32 %v631, %v641
        %v652 = vadd.f32 %v632, %v641
        %v653 = vadd.f32 %v633, %v641
        %v654 = vadd.f32 %v634, %v641
        %v655 = vadd.f32 %v635, %v641
        %v656 = vadd.f32 %v636, %v641
        %v657 = vadd.f32 %v637, %v641
        %v658 = vadd.f32 %v638, %v641
        %v659 = vmax.f32 %v643, 0.0
        %v660 = vmax.f32 %v644, 0.0
        %v661 = vmax.f32 %v645, 0.0
        %v662 = vmax.f32 %v646, 0.0
        %v663 = vmax.f32 %v647, 0.0
        %v664 = vmax.f32 %v648, 0.0
        %v665 = vmax.f32 %v649, 0.0
        %v666 = vmax.f32 %v650, 0.0
        %v667 = vmax.f32 %v651, 0.0
        %v668 = vmax.f32 %v652, 0.0
        %v669 = vmax.f32 %v653, 0.0
        %v670 = vmax.f32 %v654, 0.0
        %v671 = vmax.f32 %v655, 0.0
        %v672 = vmax.f32 %v656, 0.0
        %v673 = vmax.f32 %v657, 0.0
        %v674 = vmax.f32 %v658, 0.0
        %v675 = vpack.c.bf16 %v660, %v659
        %v676 = vpack.c.bf16 %v662, %v661
        %v677 = vpack.c.bf16 %v664, %v663
        %v678 = vpack.c.bf16 %v666, %v665
        %v679 = vpack.c.bf16 %v668, %v667
        %v680 = vpack.c.bf16 %v670, %v669
        %v681 = vpack.c.bf16 %v672, %v671
        %v682 = vpack.c.bf16 %v674, %v673
        %v683 = vld [vmem:[%s7] sm:$0xf]
        %v684 = vld [vmem:[%s7 + $0x4] sm:$0xf]
        %v685 = vld [vmem:[%s7 + $0x8] sm:$0xf]
        %v686 = vld [vmem:[%s7 + $0xc] sm:$0xf]
        %v687 = vld [vmem:[%s7 + $0x10] sm:$0xf]
        %v688 = vld [vmem:[%s7 + $0x14] sm:$0xf]
        %v689 = vld [vmem:[%s7 + $0x18] sm:$0xf]
        %v690 = vld [vmem:[%s7 + $0x1c] sm:$0xf]
        %v691 = vld [vmem:[%s8] sm:$0x1]
        %v693 = vperm.slane %v691, 0
        %v703 = vunpack.c.l.b16 %v683
        %v704 = vunpack.c.l.b16 %v684
        %v705 = vunpack.c.l.b16 %v685
        %v706 = vunpack.c.l.b16 %v686
        %v707 = vunpack.c.l.b16 %v687
        %v708 = vunpack.c.l.b16 %v688
        %v709 = vunpack.c.l.b16 %v689
        %v710 = vunpack.c.l.b16 %v690
        %v711 = vpack.c.b16 %v704, %v703
        %v712 = vpack.c.b16 %v706, %v705
        %v713 = vpack.c.b16 %v708, %v707
        %v714 = vpack.c.b16 %v710, %v709
        %v720 = vsel %vm545, %v675, 0
        %v723 = vsel %vm545, %v676, 0
        %v726 = vsel %vm545, %v677, 0
        %v729 = vsel %vm545, %v678, 0
        %v732 = vsel %vm545, %v679, 0
        %v735 = vsel %vm545, %v680, 0
        %v738 = vsel %vm545, %v681, 0
        %v741 = vsel %vm545, %v682, 0
        %743 = vmatpush.bf16.msra.mxu0 0
        %744 = vmatpush.bf16.msra.mxu0 0
        %745 = vmatpush.bf16.msra.mxu0 0
        %746 = vmatpush.bf16.msra.mxu0 0
        %747 = vmatpush.bf16.msra.mxu0 %v714
        %748 = vmatpush.bf16.msra.mxu0 %v713
        %749 = vmatpush.bf16.msra.mxu0 %v712
        %750 = vmatpush.bf16.msra.mxu0 %v711
        %751 = vmatmul.bf16.gmra.mxu0 %v720
        %v752 = vpop.f32.mrf.mxu0
        %v753 = vadd.f32 %v693, %v752
        %v754 = vpop.f32.mrf.mxu0
        %v755 = vadd.f32 %v693, %v754
        %756 = vmatmul.bf16.gmra.mxu0 %v723
        %v757 = vpop.f32.mrf.mxu0
        %v758 = vadd.f32 %v693, %v757
        %v759 = vpop.f32.mrf.mxu0
        %v760 = vadd.f32 %v693, %v759
        %761 = vmatmul.bf16.gmra.mxu0 %v726
        %v762 = vpop.f32.mrf.mxu0
        %v763 = vadd.f32 %v693, %v762
        %v764 = vpop.f32.mrf.mxu0
        %v765 = vadd.f32 %v693, %v764
        %766 = vmatmul.bf16.gmra.mxu0 %v729
        %v767 = vpop.f32.mrf.mxu0
        %v768 = vadd.f32 %v693, %v767
        %v769 = vpop.f32.mrf.mxu0
        %v770 = vadd.f32 %v693, %v769
        %771 = vmatmul.bf16.gmra.mxu0 %v732
        %v772 = vpop.f32.mrf.mxu0
        %v773 = vadd.f32 %v693, %v772
        %v774 = vpop.f32.mrf.mxu0
        %v775 = vadd.f32 %v693, %v774
        %776 = vmatmul.bf16.gmra.mxu0 %v735
        %v777 = vpop.f32.mrf.mxu0
        %v778 = vadd.f32 %v693, %v777
        %v779 = vpop.f32.mrf.mxu0
        %v780 = vadd.f32 %v693, %v779
        %781 = vmatmul.bf16.gmra.mxu0 %v738
        %v782 = vpop.f32.mrf.mxu0
        %v783 = vadd.f32 %v693, %v782
        %v784 = vpop.f32.mrf.mxu0
        %v785 = vadd.f32 %v693, %v784
        %786 = vmatmul.bf16.gmra.mxu0 %v741
        %v787 = vpop.f32.mrf.mxu0
        %v788 = vadd.f32 %v693, %v787
        %v789 = vpop.f32.mrf.mxu0
        %v790 = vadd.f32 %v693, %v789
        %791 = vdwg.mxu0
        %792 = vst [vmem:[%s326] sm:$0xff] %v753
        %793 = vst [vmem:[%s326 + $0x8] sm:$0xff] %v755
        %794 = vst [vmem:[%s326 + $0x10] sm:$0xff] %v758
        %795 = vst [vmem:[%s326 + $0x18] sm:$0xff] %v760
        %796 = vst [vmem:[%s326 + $0x20] sm:$0xff] %v763
        %797 = vst [vmem:[%s326 + $0x28] sm:$0xff] %v765
        %798 = vst [vmem:[%s326 + $0x30] sm:$0xff] %v768
        %799 = vst [vmem:[%s326 + $0x38] sm:$0xff] %v770
        %800 = vst [vmem:[%s326 + $0x40] sm:$0xff] %v773
        %801 = vst [vmem:[%s326 + $0x48] sm:$0xff] %v775
        %802 = vst [vmem:[%s326 + $0x50] sm:$0xff] %v778
        %803 = vst [vmem:[%s326 + $0x58] sm:$0xff] %v780
        %804 = vst [vmem:[%s326 + $0x60] sm:$0xff] %v783
        %805 = vst [vmem:[%s326 + $0x68] sm:$0xff] %v785
        %806 = vst [vmem:[%s326 + $0x70] sm:$0xff] %v788
        %807 = vst [vmem:[%s326 + $0x78] sm:$0xff] %v790
        %s808 = sand.u32 %s225, 1
        %s809 = scalar_lea.sflag [#allocation3], %s808
        %s810 = sand.u32 %s225, 1
        %s811 = smul.addr %s810, 128
        %s812 = scalar_lea.vmem [#allocation2], %s811
        // Predicated region
        $region57: #{tpu_custom_call.1} parent=55 // pred_check
          %p813 = pneg %p235
        $region58: #{tpu_custom_call.1} parent=55 // pred_check_branch
          %815 = sbr.rel (%p813) target = $region60
        $region59: #{tpu_custom_call.1} parent=55 // pred_region
          %s816 = smul.u32 16, %s23
          %818 = vsyncadd %s809, 0
          %s819 = smul.addr %s816, 8
          %s820 = scalar_lea.hbm %s9, %s819
          %s821 = sshll.u32 %s812, 4
          %s822 = int_to_ptr.vmem [resolvable:$true] %s821
          %s823 = sshll.u32 %s820, 4
          %s824 = int_to_ptr.hbm [resolvable:$true] %s823
          %829 = dma.vmem_to_hbm [thread:$0]  %s822, 2048, %s824, %s809, 128, 128, 8
        $region60: #{tpu_custom_call.1} parent=55 // pred_fallthru
          _
      $region56: #{tpu_custom_call.1} parent=5 // pred_fallthru
        _
      %p830 = scmp.le.s32.totalorder 2, %s18
      // Predicated region
      $region61: #{tpu_custom_call.1} parent=5 // pred_check
        %p831 = pneg %p830
      $region62: #{tpu_custom_call.1} parent=5 // pred_check_branch
        %833 = sbr.rel (%p831) target = $region64
      $region63: #{tpu_custom_call.1} parent=5 // pred_region
        %s834 = ssub.s32 %s18, 2
        // Predicated region
        $region65: #{tpu_custom_call.1} parent=63 // pred_check
          %p835 = pneg %p241
        $region66: #{tpu_custom_call.1} parent=63 // pred_check_branch
          %837 = sbr.rel (%p835) target = $region68
        $region67: #{tpu_custom_call.1} parent=63 // pred_region
          %s838 = sand.u32 %s226, 1
          %s839 = scalar_lea.sflag [#allocation3], %s838
          %s840 = sand.u32 %s226, 1
          %s841 = smul.addr %s840, 128
          %s842 = scalar_lea.vmem [#allocation2], %s841
          %844 = dma.done %s839, 2048
        $region68: #{tpu_custom_call.1} parent=63 // pred_fallthru
          _
      $region64: #{tpu_custom_call.1} parent=5 // pred_fallthru
        _
    $region6: #{tpu_custom_call.1} parent=1 // loop_footer
      %s22 = sadd.s32 1, %s18
    $region7: #{tpu_custom_call.1} parent=1 // loop_footer_branch
      %17 = sbr.rel target = $region3
    $region8: #{tpu_custom_call.1} parent=1 // loop_exit
      _
    %845 = vsyncpa [#allocation3], 1
    %s846 = scalar_lea.sflag [#allocation3], 1
    %847 = vsyncpa %s846, 1

</llo_original>
